<compile_context>
chip_gen: v7x
topology: tpu7x:2x2x1
jax: 0.10.0
libtpu: 0.0.40
codegen_flags: <defaults>
</compile_context>

<pallas_src>
import functools

import jax
import jax.numpy as jnp
from jax import lax
from jax.experimental import pallas as pl
from jax.experimental.pallas import tpu as pltpu

# --- module config flags ---
normaliseActivationSparsityBatch = True
normaliseActivationSparsityLayer = False   # TODO(synk): Instance/Layer/GroupNorm branch not enabled in this config
trainLocal = True
trainOrTest = True
networkHemispherical = False

EPS = 1e-5     # nn.BatchNorm2d default eps
LANE = 128


# ----------------------------- sizing helpers -----------------------------

def _vmem_budget_bytes():
    """Generation-aware scoped-VMEM budget (~48 MiB on v7x, ~96 MiB on v5e/v6e)."""
    cap = 128 * 1024 * 1024
    try:
        info = pltpu.get_tpu_info()
        cap = int(getattr(info, "vmem_capacity_bytes", cap) or cap)
    except Exception:
        pass
    return int(min(96 * 1024 * 1024, (cap * 3) // 4))


def _pick_divisor_tile(dim, cap, align):
    """Largest divisor of `dim` that is a multiple of `align` and <= cap (or the full dim)."""
    cap = max(align, cap)
    if dim <= cap:
        return dim
    d = (cap // align) * align
    while d >= align:
        if dim % d == 0:
            return d
        d -= align
    return dim


def _legal_c_tiles(C):
    """Channel tiles: divisors of C whose block (second-to-last dim) is %8==0 or the full dim."""
    return [d for d in range(C, 0, -1) if C % d == 0 and (d % 8 == 0 or d == C)]


def _pick_fused_c_tile(C, Ng, HWp, budget, n_groups):
    """Largest legal channel tile whose (Ng, c_tile, HWp) slab (with f32 working set and
    double-buffered in/out) fits the VMEM budget.  None -> use the two-pass path."""
    def fits(d):
        return Ng * d * HWp * 4 * 8 <= budget      # ~8 f32-slab-equivalents of headroom

    cands = _legal_c_tiles(C)
    if n_groups == 1:
        # keep >=2 parallel grid blocks so v7x's second TensorCore is not idle
        sub = [d for d in cands if d < C and fits(d)]
        if sub:
            return sub[0]
    for d in cands:
        if fits(d):
            return d
    return None


def _choose_fallback_tiles(Ng, C, HWp, dtype_bytes, budget, target_elems, n_groups):
    """Tile sizes for the two-pass path, shrunk until the VMEM estimate fits the budget."""
    c_cands = _legal_c_tiles(C)
    c_min = c_cands[-1]
    t = max(LANE, int(target_elems))
    while True:
        hw_tile = _pick_divisor_tile(HWp, max(LANE, t // max(c_min, 1)), LANE)
        c_cap = max(1, t // hw_tile)
        c_tile = next((d for d in c_cands if d <= c_cap), c_min)
        if n_groups == 1 and c_tile == C and len(c_cands) > 1:
            c_tile = c_cands[1]        # expose a second parallel block for the other TC (v7x)
        n_blk = _pick_divisor_tile(Ng, max(1, t // (hw_tile * c_tile)), 1)

        x_block = n_blk * c_tile * hw_tile
        est = (4 * x_block * dtype_bytes        # double-buffered input + output blocks
               + 3 * x_block * 4                # f32 temporaries (cast / centered / squared)
               + 2 * c_tile * hw_tile * 4       # sum / sum-of-squares scratch
               + 7 * c_tile * LANE * 4)         # pilot scratch + small stat outputs
        if est <= budget:
            return c_tile, hw_tile, n_blk
        if t <= LANE:
            raise ValueError("BatchNorm Pallas tiling cannot fit the VMEM budget")
        t = max(LANE, t // 2)


def _rsum02(v):
    """Reduce a (n, c, hw) value over axes 0 and 2 -> (1, c, 1)."""
    return jnp.sum(jnp.sum(v, axis=0, keepdims=True), axis=2, keepdims=True)


# ----------------------------- kernels -----------------------------

def _bn_fused_kernel(x_ref, gamma_ref, beta_ref, o_ref, *, count, hw_real, hw_pad, eps):
    """Single-pass BN: slab resident in VMEM, centered variance, fused normalize+affine."""
    x = x_ref[...].astype(jnp.float32)                     # (Ng, c_tile, HWp)
    inv_count = jnp.float32(1.0 / count)
    mean = _rsum02(x) * inv_count                          # padded zeros contribute 0 to the sum
    diff = x - mean
    if hw_pad != hw_real:                                  # mask pad out of the variance
        lane = lax.broadcasted_iota(jnp.int32, x.shape, 2)
        dm = jnp.where(lane < hw_real, diff, 0.0)
    else:
        dm = diff
    var = _rsum02(dm * dm) * inv_count
    scale = gamma_ref[:, :, 0:1] * lax.rsqrt(var + eps)    # EUP rsqrt
    o_ref[...] = (diff * scale + beta_ref[:, :, 0:1]).astype(o_ref.dtype)


def _bn_stats_kernel(x_ref, s1_ref, s2_ref, p_ref, sum_acc, sq_acc, pilot_acc,
                     *, hw_tile, hw_real, hw_pad):
    """Two-pass path, pass 1: pilot-shifted sum / sum-of-squares per (group, channel)."""
    n_i = pl.program_id(2)
    l_i = pl.program_id(3)
    first = (n_i == 0) & (l_i == 0)
    last = (n_i == pl.num_programs(2) - 1) & (l_i == pl.num_programs(3) - 1)

    x = x_ref[...].astype(jnp.float32)                     # (n_blk, c_tile, hw_tile)

    @pl.when(first)
    def _():
        sum_acc[...] = jnp.zeros_like(sum_acc)
        sq_acc[...] = jnp.zeros_like(sq_acc)
        # Pilot mean from the first block: shifting by it removes the catastrophic
        # cancellation of E[x^2] - mean^2 while keeping a single sweep over x.
        p = _rsum02(x) * jnp.float32(1.0 / (x.shape[0] * x.shape[2]))
        pilot_acc[...] = jnp.broadcast_to(p, pilot_acc.shape)

    xc = x - pilot_acc[:, :, 0:1]
    if hw_pad != hw_real:
        lane = l_i * hw_tile + lax.broadcasted_iota(jnp.int32, x.shape, 2)
        xc = jnp.where(lane < hw_real, xc, 0.0)
    # Pure VPU adds per step; the cross-lane (XLU) reduction happens only once, below.
    sum_acc[...] += jnp.sum(xc, axis=0, keepdims=True)
    sq_acc[...] += jnp.sum(xc * xc, axis=0, keepdims=True)

    @pl.when(last)
    def _():
        s1 = jnp.sum(sum_acc[...], axis=-1, keepdims=True)
        s2 = jnp.sum(sq_acc[...], axis=-1, keepdims=True)
        s1_ref[...] = jnp.broadcast_to(s1, s1_ref.shape)
        s2_ref[...] = jnp.broadcast_to(s2, s2_ref.shape)
        p_ref[...] = pilot_acc[...]


def _bn_apply_kernel(x_ref, scale_ref, shift_ref, o_ref):
    """Two-pass path, pass 2: y = x * scale[c] + shift[c] (single FMA per element)."""
    x = x_ref[...].astype(jnp.float32)
    o_ref[...] = (x * scale_ref[:, :, 0:1] + shift_ref[:, :, 0:1]).astype(o_ref.dtype)


# ----------------------------- wrapper -----------------------------

def batchnorm2d_groups(x_nchw, gamma, beta, n_groups, eps=EPS,
                       force_two_pass=False, target_elems=None):
    """Training-mode BatchNorm2d applied independently to `n_groups` contiguous batch groups
    (n_groups=2 reproduces ArbitraryLayerVICregLocal's half split; n_groups=1 is plain BN)."""
    N, C, H, W = x_nchw.shape
    assert N % n_groups == 0, "batch must split evenly into groups"
    HW = H * W
    HWp = ((HW + LANE - 1) // LANE) * LANE
    Ng = N // n_groups

    budget = _vmem_budget_bytes()
    dtype_bytes = jnp.dtype(x_nchw.dtype).itemsize

    # Free, contiguous reshape NCHW -> (N, C, HW); lane-pad HW for dense vector stores.
    x = x_nchw.reshape(N, C, HW)
    if HWp != HW:
        x = jnp.pad(x, ((0, 0), (0, 0), (0, HWp - HW)))

    gamma_b = jnp.broadcast_to(gamma.astype(jnp.float32).reshape(1, C, 1), (1, C, LANE))
    beta_b = jnp.broadcast_to(beta.astype(jnp.float32).reshape(1, C, 1), (1, C, LANE))
    count = float(Ng * HW)

    c_tile_fused = None if force_two_pass else _pick_fused_c_tile(C, Ng, HWp, budget, n_groups)

    if c_tile_fused is not None:
        # ---- fused single-pass path: read x once, write y once ----
        c_tile = c_tile_fused
        grid = (n_groups, C // c_tile)
        x_spec = pl.BlockSpec((Ng, c_tile, HWp), lambda g, c: (g, c, 0))
        param_spec = pl.BlockSpec((1, c_tile, LANE), lambda g, c: (0, c, 0))
        kern = functools.partial(_bn_fused_kernel, count=count, hw_real=HW, hw_pad=HWp, eps=eps)
        y = pl.pallas_call(
            kern,
            out_shape=jax.ShapeDtypeStruct((N, C, HWp), x.dtype),
            grid=grid,
            in_specs=[x_spec, param_spec, param_spec],
            out_specs=x_spec,
            compiler_params=pltpu.CompilerParams(
                dimension_semantics=("parallel", "parallel"),
                vmem_limit_bytes=budget),
        )(x, gamma_b, beta_b)
    else:
        # ---- two-pass fallback for slabs too large for VMEM ----
        if target_elems is None:
            target_elems = min(2 * 1024 * 1024, budget // 40)   # ~4-8 MiB f32 streaming blocks
        c_tile, hw_tile, n_blk = _choose_fallback_tiles(
            Ng, C, HWp, dtype_bytes, budget, target_elems, n_groups)
        c_blocks = C // c_tile
        n_blocks = Ng // n_blk
        hw_blocks = HWp // hw_tile
        grid = (n_groups, c_blocks, n_blocks, hw_blocks)

        def x_map(g, c, n, l):
            return (g * n_blocks + n, c, l)

        def stat_map(g, c, n, l):
            return (g, c, 0)

        x_spec = pl.BlockSpec((n_blk, c_tile, hw_tile), x_map)
        stat_spec = pl.BlockSpec((1, c_tile, LANE), stat_map)
        stat_shape = jax.ShapeDtypeStruct((n_groups, C, LANE), jnp.float32)

        stats_kern = functools.partial(_bn_stats_kernel, hw_tile=hw_tile, hw_real=HW, hw_pad=HWp)
        s1, s2, pilot = pl.pallas_call(
            stats_kern,
            out_shape=(stat_shape, stat_shape, stat_shape),
            grid=grid,
            in_specs=[x_spec],
            out_specs=(stat_spec, stat_spec, stat_spec),
            scratch_shapes=[pltpu.VMEM((1, c_tile, hw_tile), jnp.float32),
                            pltpu.VMEM((1, c_tile, hw_tile), jnp.float32),
                            pltpu.VMEM((1, c_tile, LANE), jnp.float32)],
            compiler_params=pltpu.CompilerParams(
                dimension_semantics=("parallel", "parallel", "arbitrary", "arbitrary"),
                vmem_limit_bytes=budget),
        )(x)

        # tiny per-(group, channel) math: fold BN into one FMA
        s1 = s1[..., 0]
        s2 = s2[..., 0]
        pilot = pilot[..., 0]                                    # (G, C)
        d = s1 / count
        mean = pilot + d
        var = jnp.maximum(s2 / count - d * d, 0.0)               # pilot-shifted -> no cancellation
        inv = lax.rsqrt(var + eps)
        scale = gamma[None, :].astype(jnp.float32) * inv
        shift = beta[None, :].astype(jnp.float32) - mean * scale
        scale_b = jnp.broadcast_to(scale[..., None], (n_groups, C, LANE))
        shift_b = jnp.broadcast_to(shift[..., None], (n_groups, C, LANE))

        y = pl.pallas_call(
            _bn_apply_kernel,
            out_shape=jax.ShapeDtypeStruct((N, C, HWp), x.dtype),
            grid=grid,
            in_specs=[x_spec, stat_spec, stat_spec],
            out_specs=x_spec,
            compiler_params=pltpu.CompilerParams(
                dimension_semantics=("parallel", "parallel", "parallel", "parallel"),
                vmem_limit_bytes=budget),
        )(x, scale_b, shift_b)

    if HWp != HW:
        y = y[..., :HW]
    return y.reshape(N, C, H, W)


class BatchNormLayerPallas:
    """JAX/Pallas equivalent of BatchNormLayer (forward only, training-mode statistics)."""

    def __init__(self, num_out_filters):
        self.num_out_filters = num_out_filters
        c = num_out_filters
        # nn.BatchNorm2d affine params; deterministic non-trivial init in-script.
        self.gamma = 1.0 + 0.1 * jnp.arange(c, dtype=jnp.float32)
        self.beta = 0.01 * jnp.arange(c, dtype=jnp.float32)
        # TODO(synk): running_mean / running_var buffers are not tracked (forward-only path).

    def __call__(self, x):
        if normaliseActivationSparsityBatch:
            if trainLocal and trainOrTest and (not networkHemispherical):
                # ArbitraryLayerVICregLocal: independent batch stats per half, fused into one
                # grid via the leading "group" axis -- no split/concat copies.
                assert x.shape[0] % 2 == 0, "ArbitraryLayerVICregLocal split assumes an even batch"
                x = batchnorm2d_groups(x, self.gamma, self.beta, n_groups=2)
            else:
                x = batchnorm2d_groups(x, self.gamma, self.beta, n_groups=1)
        if normaliseActivationSparsityLayer:
            # TODO(synk): InstanceNorm2d / LayerNorm / GroupNorm variants not implemented (flag off).
            pass
        return x


def _reference(x, gamma, beta, n_groups=2, eps=EPS):
    """Pure-JAX reference of the same forward (split-batch training-mode BN)."""
    def bn(h):
        mean = jnp.mean(h, axis=(0, 2, 3), keepdims=True)
        var = jnp.mean((h - mean) ** 2, axis=(0, 2, 3), keepdims=True)
        g = gamma.reshape(1, -1, 1, 1)
        b = beta.reshape(1, -1, 1, 1)
        return (h - mean) * lax.rsqrt(var + eps) * g + b
    n = x.shape[0] // n_groups
    return jnp.concatenate([bn(x[i * n:(i + 1) * n]) for i in range(n_groups)], axis=0)


if __name__ == "__main__":
    # --- fused single-pass path (default), shapes consistent with the module ---
    key = jax.random.PRNGKey(0)
    N, C, H, W = 4, 4, 16, 16
    x = jax.random.normal(key, (N, C, H, W), dtype=jnp.float32) + 3.0  # nonzero mean stresses the variance math
    layer = BatchNormLayerPallas(num_out_filters=C)
    y = jax.block_until_ready(layer(x))
    y_ref = _reference(x, layer.gamma, layer.beta, n_groups=2)
    assert y.shape == x.shape
    assert jnp.allclose(y, y_ref, atol=1e-4, rtol=1e-4), "fused path mismatch vs. pure-JAX reference"

    # --- exercise the two-pass fallback (forced small tiles, non-128-multiple HW -> lane padding) ---
    key2 = jax.random.PRNGKey(1)
    N2, C2, H2, W2 = 8, 8, 10, 10
    x2 = jax.random.normal(key2, (N2, C2, H2, W2), dtype=jnp.float32) + 3.0
    g2 = 1.0 + 0.05 * jnp.arange(C2, dtype=jnp.float32)
    b2 = 0.02 * jnp.arange(C2, dtype=jnp.float32)
    y2 = jax.block_until_ready(
        batchnorm2d_groups(x2, g2, b2, n_groups=2, force_two_pass=True, target_elems=1024))
    y2_ref = _reference(x2, g2, b2, n_groups=2)
    assert jnp.allclose(y2, y2_ref, atol=1e-4, rtol=1e-4), "two-pass path mismatch vs. pure-JAX reference"

    print("KERNEL_OK")
</pallas_src>

<mosaic_0001>
module attributes {stable_mosaic.version = 11 : i64} {
  func.func @_bn_fused_kernel(%arg0: i32, %arg1: i32, %arg2: memref<2x4x256xf32, #tpu.memory_space<vmem>>, %arg3: memref<1x4x128xf32, #tpu.memory_space<vmem>>, %arg4: memref<1x4x128xf32, #tpu.memory_space<vmem>>, %arg5: memref<2x4x256xf32, #tpu.memory_space<vmem>>) attributes {dimension_semantics = [#tpu.dimension_semantics<parallel>, #tpu.dimension_semantics<parallel>], iteration_bounds = array<i64: 2, 1>, scalar_prefetch = 0 : i64, scratch_operands = 0 : i64, tpu.core_type = #tpu.core_type<tc>, window_params = [{transform_indices = @transform_0, window_bounds = array<i64: 2, 4, 256>}, {transform_indices = @transform_1, window_bounds = array<i64: 1, 4, 128>}, {transform_indices = @transform_2, window_bounds = array<i64: 1, 4, 128>}, {transform_indices = @transform_3, window_bounds = array<i64: 2, 4, 256>}]} {
    %c0 = arith.constant 0 : index
    %c0_0 = arith.constant 0 : index
    %c0_1 = arith.constant 0 : index
    %0 = vector.load %arg2[%c0, %c0_0, %c0_1] : memref<2x4x256xf32, #tpu.memory_space<vmem>>, vector<2x4x256xf32>
    %cst = arith.constant dense<0.000000e+00> : vector<4x256xf32>
    %1 = vector.multi_reduction <add>, %0, %cst [0] : vector<2x4x256xf32> to vector<4x256xf32>
    %2 = vector.shape_cast %1 : vector<4x256xf32> to vector<1x4x256xf32>
    %cst_2 = arith.constant dense<0.000000e+00> : vector<1x4xf32>
    %3 = vector.multi_reduction <add>, %2, %cst_2 [2] : vector<1x4x256xf32> to vector<1x4xf32>
    %4 = vector.shape_cast %3 : vector<1x4xf32> to vector<1x4x1xf32>
    %cst_3 = arith.constant 0.001953125 : f32
    %5 = vector.broadcast %cst_3 : f32 to vector<1x4x1xf32>
    %6 = arith.mulf %4, %5 : vector<1x4x1xf32>
    %7 = vector.broadcast %6 : vector<1x4x1xf32> to vector<2x4x256xf32>
    %8 = arith.subf %0, %7 : vector<2x4x256xf32>
    %9 = arith.mulf %8, %8 : vector<2x4x256xf32>
    %cst_4 = arith.constant dense<0.000000e+00> : vector<4x256xf32>
    %10 = vector.multi_reduction <add>, %9, %cst_4 [0] : vector<2x4x256xf32> to vector<4x256xf32>
    %11 = vector.shape_cast %10 : vector<4x256xf32> to vector<1x4x256xf32>
    %cst_5 = arith.constant dense<0.000000e+00> : vector<1x4xf32>
    %12 = vector.multi_reduction <add>, %11, %cst_5 [2] : vector<1x4x256xf32> to vector<1x4xf32>
    %13 = vector.shape_cast %12 : vector<1x4xf32> to vector<1x4x1xf32>
    %cst_6 = arith.constant 0.001953125 : f32
    %14 = vector.broadcast %cst_6 : f32 to vector<1x4x1xf32>
    %15 = arith.mulf %13, %14 : vector<1x4x1xf32>
    %c0_7 = arith.constant 0 : index
    %c0_8 = arith.constant 0 : index
    %c0_9 = arith.constant 0 : index
    %16 = vector.load %arg3[%c0_7, %c0_8, %c0_9] : memref<1x4x128xf32, #tpu.memory_space<vmem>>, vector<1x4x1xf32>
    %cst_10 = arith.constant 9.99999974E-6 : f32
    %17 = vector.broadcast %cst_10 : f32 to vector<1x4x1xf32>
    %18 = arith.addf %15, %17 : vector<1x4x1xf32>
    %19 = math.rsqrt %18 : vector<1x4x1xf32>
    %20 = arith.mulf %16, %19 : vector<1x4x1xf32>
    %21 = vector.broadcast %20 : vector<1x4x1xf32> to vector<2x4x256xf32>
    %22 = arith.mulf %8, %21 : vector<2x4x256xf32>
    %c0_11 = arith.constant 0 : index
    %c0_12 = arith.constant 0 : index
    %c0_13 = arith.constant 0 : index
    %23 = vector.load %arg4[%c0_11, %c0_12, %c0_13] : memref<1x4x128xf32, #tpu.memory_space<vmem>>, vector<1x4x1xf32>
    %24 = vector.broadcast %23 : vector<1x4x1xf32> to vector<2x4x256xf32>
    %25 = arith.addf %22, %24 : vector<2x4x256xf32>
    %c0_14 = arith.constant 0 : index
    %c0_15 = arith.constant 0 : index
    %c0_16 = arith.constant 0 : index
    %26 = vector.load %arg5[%c0_14, %c0_15, %c0_16] : memref<2x4x256xf32, #tpu.memory_space<vmem>>, vector<2x4x256xf32>
    tpu.vector_store %arg5[%c0_14, %c0_15, %c0_16], %25 {strides = array<i32>} : memref<2x4x256xf32, #tpu.memory_space<vmem>>, vector<2x4x256xf32>,
    return
  }
  func.func @transform_0(%arg0: i32, %arg1: i32) -> (i32, i32, i32) {
    %c0_i32 = arith.constant 0 : i32
    %c0_i32_0 = arith.constant 0 : i32
    return %arg0, %arg1, %c0_i32 : i32, i32, i32
  }
  func.func @transform_1(%arg0: i32, %arg1: i32) -> (i32, i32, i32) {
    %c0_i32 = arith.constant 0 : i32
    %c0_i32_0 = arith.constant 0 : i32
    %c0_i32_1 = arith.constant 0 : i32
    return %c0_i32, %arg1, %c0_i32_0 : i32, i32, i32
  }
  func.func @transform_2(%arg0: i32, %arg1: i32) -> (i32, i32, i32) {
    %c0_i32 = arith.constant 0 : i32
    %c0_i32_0 = arith.constant 0 : i32
    %c0_i32_1 = arith.constant 0 : i32
    return %c0_i32, %arg1, %c0_i32_0 : i32, i32, i32
  }
  func.func @transform_3(%arg0: i32, %arg1: i32) -> (i32, i32, i32) {
    %c0_i32 = arith.constant 0 : i32
    %c0_i32_0 = arith.constant 0 : i32
    return %arg0, %arg1, %c0_i32 : i32, i32, i32
  }
}

</mosaic_0001>

<llo_original>
// kernel: tpu_custom_call.1
$region0: #{tpu_custom_call.1}
  #allocation0 [shape = 'u32[]', space=smem, size = 0x4, offset = 0x4, fixed_abs, tag = 'smem constant byte address 0x4 - core index']
  #allocation1 [shape = 'u32[144,128]{1,0:T(1,128)}', space=vmem, size = 0x12000, scoped, tag = 'internal scratch']
  %s0 = inlined_call_operand.hbm [shape: f32[4,4,256], index: 0, kind: input, shape index: {}]
  %s1 = inlined_call_operand.hbm [shape: f32[1,4,128], index: 1, kind: input, shape index: {}]
  %s2 = inlined_call_operand.hbm [shape: f32[1,4,128], index: 2, kind: input, shape index: {}]
  %s3 = inlined_call_operand.hbm [shape: f32[4,4,256], index: 3, kind: output, shape index: {}]
  %s4 = sld [smem:[#allocation0]]
  $region57: #{tpu_custom_call.1} parent=0
    _
  %s6 = ssub.s32 1, %s4
  %s7 = scalar_select 0, %s6, %s4
  $region1: #{tpu_custom_call.1} parent=0
    #allocation2 [shape = 'u8[16384]{0}', space=vmem, size = 0x4000, scoped, tag = 'input window, operand 0']
    #allocation3 [shape = 's32[2]{0}', space=sflag, size = 0x8, scoped, tag = 'scoped memory for tpu_custom_call.1']
    #allocation4 [shape = 's32[2]{0}', space=sflag, size = 0x8, scoped, tag = 'scoped memory for tpu_custom_call.1']
    #allocation5 [shape = 'u8[2048]{0}', space=vmem, size = 0x800, scoped, tag = 'input window, operand 1, single buffered']
    #allocation6 [shape = 's32[1]{0}', space=sflag, size = 0x4, scoped, tag = 'scoped memory for tpu_custom_call.1']
    #allocation7 [shape = 'u8[2048]{0}', space=vmem, size = 0x800, scoped, tag = 'input window, operand 2, single buffered']
    #allocation8 [shape = 'u8[16384]{0}', space=vmem, size = 0x4000, scoped, tag = 'output window, operand 0']
    %8 = vsyncpa [#allocation3], 0
    %s9 = scalar_lea.sflag [#allocation3], 1
    %10 = vsyncpa %s9, 0
    %11 = vsyncpa [#allocation6], 0
    %12 = vsyncpa [#allocation4], 0
    %s13 = scalar_lea.sflag [#allocation4], 1
    %14 = vsyncpa %s13, 0
    loop: start=0, step=1, limit=4
    $region2: #{tpu_custom_call.1} parent=1 // loop_pre_header
      _
    $region3: #{tpu_custom_call.1} parent=1 // loop_header
      %s16 = sphi 0, %s20
      %p17 = scmp.ge.s32.totalorder %s16, 4
      %s23 = sphi 0, %s35
      %s24 = sphi 0, %s31
      %s25 = sphi 0, %s23
      %s26 = sphi 0, %s24
      %s27 = sphi 0, %s25
      %s28 = sphi 0, %s26
      %s40 = sphi 0, %s42
      %s43 = sphi 0, %s40
      %s44 = sphi 0, %s43
      %s60 = sphi 0, %s44
      %s66 = sphi 0, %s68
      %s69 = sphi 0, %s66
      %s70 = sphi 0, %s69
      %s86 = sphi 0, %s70
      %s92 = sphi 0, %s94
      %s95 = sphi 0, %s92
      %s96 = sphi 0, %s95
      %s112 = sphi 0, %s96
      %s120 = sphi 0, %s122
      %s123 = sphi 0, %s120
      %s124 = sphi 0, %s123
      %s140 = sphi 0, %s124
    $region4: #{tpu_custom_call.1} parent=1 // loop_header_branch
      %19 = sbr.rel (%p17) target = $region8
    $region5: #{tpu_custom_call.1} parent=1 // loop_body
      %s21 = ssub.s32 %s16, 1
      %s22 = ssub.s32 %s16, 2
      %s29 = sadd.s32 1, %s24
      %p30 = scmp.ge.s32.totalorder %s29, 1
      %s31 = scalar_select %p30, 0, %s29
      %s32 = sadd.s32 1, %s23
      %s33 = scalar_select %p30, %s32, %s23
      %p34 = scmp.ge.s32.totalorder %s33, 2
      %s35 = scalar_select %p34, 0, %s33
      %s36 = ssub.s32 %s23, %s35
      %s37 = ssub.s32 %s24, %s31
      %s38 = sor.u32 %s36, %s37
      %p39 = scmp.eq.s32.totalorder %s38, 0
      %s41 = sadd.s32 %s40, 1
      %s42 = scalar_select %p39, %s40, %s41
      %p45 = pneg %p39
      %p46 = scmp.eq.s32.totalorder %s16, 1
      %p47 = por %p45, %p46
      %p48 = scmp.ne.s32.totalorder %s40, %s43
      %p49 = scmp.eq.s32.totalorder %s16, 0
      %p50 = por %p48, %p49
      %p51 = scmp.ne.s32.totalorder %s40, %s43
      %p52 = scmp.eq.s32.totalorder %s21, 1
      %p53 = por %p51, %p52
      %p54 = scmp.ne.s32.totalorder %s43, %s44
      %p55 = scmp.eq.s32.totalorder %s21, 0
      %p56 = por %p54, %p55
      %p57 = scmp.ne.s32.totalorder %s43, %s44
      %p58 = scmp.eq.s32.totalorder %s22, 1
      %p59 = por %p57, %p58
      %p61 = scmp.ne.s32.totalorder %s44, %s60
      %p62 = scmp.eq.s32.totalorder %s22, 0
      %p63 = por %p61, %p62
      %s64 = ssub.s32 %s24, %s31
      %p65 = scmp.eq.s32.totalorder %s64, 0
      %s67 = sadd.s32 %s66, 1
      %s68 = scalar_select %p65, %s66, %s67
      %p71 = pneg %p65
      %p72 = scmp.eq.s32.totalorder %s16, 1
      %p73 = por %p71, %p72
      %p74 = scmp.ne.s32.totalorder %s66, %s69
      %p75 = scmp.eq.s32.totalorder %s16, 0
      %p76 = por %p74, %p75
      %p77 = scmp.ne.s32.totalorder %s66, %s69
      %p78 = scmp.eq.s32.totalorder %s21, 1
      %p79 = por %p77, %p78
      %p80 = scmp.ne.s32.totalorder %s69, %s70
      %p81 = scmp.eq.s32.totalorder %s21, 0
      %p82 = por %p80, %p81
      %p83 = scmp.ne.s32.totalorder %s69, %s70
      %p84 = scmp.eq.s32.totalorder %s22, 1
      %p85 = por %p83, %p84
      %p87 = scmp.ne.s32.totalorder %s70, %s86
      %p88 = scmp.eq.s32.totalorder %s22, 0
      %p89 = por %p87, %p88
      %s90 = ssub.s32 %s24, %s31
      %p91 = scmp.eq.s32.totalorder %s90, 0
      %s93 = sadd.s32 %s92, 1
      %s94 = scalar_select %p91, %s92, %s93
      %p97 = pneg %p91
      %p98 = scmp.eq.s32.totalorder %s16, 1
      %p99 = por %p97, %p98
      %p100 = scmp.ne.s32.totalorder %s92, %s95
      %p101 = scmp.eq.s32.totalorder %s16, 0
      %p102 = por %p100, %p101
      %p103 = scmp.ne.s32.totalorder %s92, %s95
      %p104 = scmp.eq.s32.totalorder %s21, 1
      %p105 = por %p103, %p104
      %p106 = scmp.ne.s32.totalorder %s95, %s96
      %p107 = scmp.eq.s32.totalorder %s21, 0
      %p108 = por %p106, %p107
      %p109 = scmp.ne.s32.totalorder %s95, %s96
      %p110 = scmp.eq.s32.totalorder %s22, 1
      %p111 = por %p109, %p110
      %p113 = scmp.ne.s32.totalorder %s96, %s112
      %p114 = scmp.eq.s32.totalorder %s22, 0
      %p115 = por %p113, %p114
      %s116 = ssub.s32 %s23, %s35
      %s117 = ssub.s32 %s24, %s31
      %s118 = sor.u32 %s116, %s117
      %p119 = scmp.eq.s32.totalorder %s118, 0
      %s121 = sadd.s32 %s120, 1
      %s122 = scalar_select %p119, %s120, %s121
      %p125 = pneg %p119
      %p126 = scmp.eq.s32.totalorder %s16, 1
      %p127 = por %p125, %p126
      %p128 = scmp.ne.s32.totalorder %s120, %s123
      %p129 = scmp.eq.s32.totalorder %s16, 0
      %p130 = por %p128, %p129
      %p131 = scmp.ne.s32.totalorder %s120, %s123
      %p132 = scmp.eq.s32.totalorder %s21, 1
      %p133 = por %p131, %p132
      %p134 = scmp.ne.s32.totalorder %s123, %s124
      %p135 = scmp.eq.s32.totalorder %s21, 0
      %p136 = por %p134, %p135
      %p137 = scmp.ne.s32.totalorder %s123, %s124
      %p138 = scmp.eq.s32.totalorder %s22, 1
      %p139 = por %p137, %p138
      %p141 = scmp.ne.s32.totalorder %s124, %s140
      %p142 = scmp.eq.s32.totalorder %s22, 0
      %p143 = por %p141, %p142
      %p144 = scmp.le.s32.totalorder 1, %s16
      %p145 = scmp.lt.s32.totalorder %s16, 3
      %p146 = pnand %p144, %p145
      %p147 = pneg %p146
      // Predicated region
      $region9: #{tpu_custom_call.1} parent=5 // pred_check
        _
      $region10: #{tpu_custom_call.1} parent=5 // pred_check_branch
        %149 = sbr.rel (%p146) target = $region12
      $region11: #{tpu_custom_call.1} parent=5 // pred_region
        %s150 = ssub.s32 %s16, 1
        // Predicated region
        $region13: #{tpu_custom_call.1} parent=11 // pred_check
          %p151 = pneg %p82
        $region14: #{tpu_custom_call.1} parent=11 // pred_check_branch
          %153 = sbr.rel (%p151) target = $region16
        $region15: #{tpu_custom_call.1} parent=11 // pred_region
          %s155 = ssub.s32 64, 64
          %156 = vsyncadd [#allocation6], %s155
          %s157 = smul.addr %s26, 64
          %s158 = scalar_lea.hbm %s1, %s157
          %s160 = sshll.u32 [#allocation5], 4
          %s161 = int_to_ptr.vmem [resolvable:$true] %s160
          %163 = dma.hbm_to_vmem [thread:$0]  %s158, 64, %s161, [#allocation6]
        $region16: #{tpu_custom_call.1} parent=11 // pred_fallthru
          _
        // Predicated region
        $region17: #{tpu_custom_call.1} parent=11 // pred_check
          %p164 = pneg %p108
        $region18: #{tpu_custom_call.1} parent=11 // pred_check_branch
          %166 = sbr.rel (%p164) target = $region20
        $region19: #{tpu_custom_call.1} parent=11 // pred_region
          %s168 = ssub.s32 64, 64
          %169 = vsyncadd [#allocation6], %s168
          %s170 = smul.addr %s26, 64
          %s171 = scalar_lea.hbm %s2, %s170
          %s173 = sshll.u32 [#allocation7], 4
          %s174 = int_to_ptr.vmem [resolvable:$true] %s173
          %176 = dma.hbm_to_vmem [thread:$0]  %s171, 64, %s174, [#allocation6]
        $region20: #{tpu_custom_call.1} parent=11 // pred_fallthru
          _
      $region12: #{tpu_custom_call.1} parent=5 // pred_fallthru
        _
      %p177 = scmp.lt.s32.totalorder %s16, 2
      // Predicated region
      $region21: #{tpu_custom_call.1} parent=5 // pred_check
        %p178 = pneg %p177
      $region22: #{tpu_custom_call.1} parent=5 // pred_check_branch
        %180 = sbr.rel (%p178) target = $region24
      $region23: #{tpu_custom_call.1} parent=5 // pred_region
        // Predicated region
        $region25: #{tpu_custom_call.1} parent=23 // pred_check
          %p181 = pneg %p50
        $region26: #{tpu_custom_call.1} parent=23 // pred_check_branch
          %183 = sbr.rel (%p181) target = $region28
        $region27: #{tpu_custom_call.1} parent=23 // pred_region
          %s184 = sand.u32 %s40, 1
          %s185 = scalar_lea.sflag [#allocation3], %s184
          %s186 = sand.u32 %s40, 1
          %s187 = smul.addr %s186, 16
          %s188 = scalar_lea.vmem [#allocation2], %s187
          %s189 = smul.u32 2, %s23
          %s191 = ssub.s32 256, 256
          %192 = vsyncadd %s185, %s191
          %s193 = smul.addr %s24, 2
          %s194 = smul.addr %s189, 2
          %s195 = sadd.s32 %s193, %s194
          %s196 = smul.addr %s195, 64
          %s197 = scalar_lea.hbm %s0, %s196
          %s198 = sshll.u32 %s188, 4
          %s199 = int_to_ptr.vmem [resolvable:$true] %s198
          %204 = dma.hbm_to_vmem [thread:$0]  %s197, 256, %s199, %s185, 128, 128, 8
        $region28: #{tpu_custom_call.1} parent=23 // pred_fallthru
          _
      $region24: #{tpu_custom_call.1} parent=5 // pred_fallthru
        _
      %p205 = scmp.le.s32.totalorder 1, %s16
      %p206 = scmp.lt.s32.totalorder %s16, 3
      %p207 = pnand %p205, %p206
      %p208 = pneg %p207
      // Predicated region
      $region29: #{tpu_custom_call.1} parent=5 // pred_check
        _
      $region30: #{tpu_custom_call.1} parent=5 // pred_check_branch
        %210 = sbr.rel (%p207) target = $region32
      $region31: #{tpu_custom_call.1} parent=5 // pred_region
        %s211 = ssub.s32 %s16, 1
        %s212 = sand.u32 %s43, 1
        %s213 = scalar_lea.sflag [#allocation3], %s212
        %s214 = sand.u32 %s43, 1
        %s215 = smul.addr %s214, 16
        %s216 = scalar_lea.vmem [#allocation2], %s215
        // Predicated region
        $region33: #{tpu_custom_call.1} parent=31 // pred_check
          %p217 = pneg %p56
        $region34: #{tpu_custom_call.1} parent=31 // pred_check_branch
          %219 = sbr.rel (%p217) target = $region36
        $region35: #{tpu_custom_call.1} parent=31 // pred_region
          %220 = dma.done %s213, 256
        $region36: #{tpu_custom_call.1} parent=31 // pred_fallthru
          _
        // Predicated region
        $region37: #{tpu_custom_call.1} parent=31 // pred_check
          %p221 = pneg %p82
        $region38: #{tpu_custom_call.1} parent=31 // pred_check_branch
          %223 = sbr.rel (%p221) target = $region40
        $region39: #{tpu_custom_call.1} parent=31 // pred_region
          %224 = dma.done [#allocation6], 64
        $region40: #{tpu_custom_call.1} parent=31 // pred_fallthru
          _
        // Predicated region
        $region41: #{tpu_custom_call.1} parent=31 // pred_check
          %p225 = pneg %p108
        $region42: #{tpu_custom_call.1} parent=31 // pred_check_branch
          %227 = sbr.rel (%p225) target = $region44
        $region43: #{tpu_custom_call.1} parent=31 // pred_region
          %228 = dma.done [#allocation6], 64
        $region44: #{tpu_custom_call.1} parent=31 // pred_fallthru
          _
        %s229 = sand.u32 %s43, 1
        %s230 = scalar_lea.sflag [#allocation3], %s229
        %s231 = sand.u32 %s43, 1
        %s232 = smul.addr %s231, 16
        %s233 = scalar_lea.vmem [#allocation2], %s232
        %p234 = pneg %p56
        %p235 = pneg %p53
        %p236 = pneg %p82
        %p237 = pneg %p79
        %p238 = pneg %p108
        %p239 = pneg %p105
        %p240 = pneg %p136
        %p241 = pneg %p133
        %s242 = sand.u32 %s123, 1
        %s243 = scalar_lea.sflag [#allocation4], %s242
        %s244 = sand.u32 %s123, 1
        %s245 = smul.addr %s244, 16
        %s246 = scalar_lea.vmem [#allocation8], %s245
        %s247 = smul.u32 2, %s25
        %s248 = smul.u32 2, %s25
        %v249 = vld [vmem:[%s216] sm:$0xff]
        %v250 = vld [vmem:[%s216 + $0x8] sm:$0xff]
        %v253 = vcombine.high %v249, %v249
        %v254 = vcombine.high %v250, %v250
        %vm257 = vcmask 1043456
        %v258 = vsel %vm257, %v249, 0.0
        %v259 = vsel %vm257, %v250, 0.0
        %v260 = vadd.f32 %v258, %v259
        %v261 = vsel %vm257, %v253, 0.0
        %v262 = vsel %vm257, %v254, 0.0
        %v263 = vadd.f32 %v261, %v262
        %v264 = vsel %vm257, %v260, 0.0
        %v265 = vsel %vm257, %v263, 0.0
        %v266 = vadd.f32 %v264, %v265
        %267 = vadd.xlane.f32.xlu0 %v266
        %v268 = vpop.xlane.xlu0 %267
        %v269 = vmul.f32 %v268, 0.001953125
        %v272 = vunpack.c.l.s4 839922192
        %v273 = vunpack.c.0.s8 %v272
        %v274 = vlaneseq
        %v275 = vshrl.u32 %v274, 7
        %v276 = vsub.s32 %v273, %v275
        %v277 = vrot.slane %v269, %v276
        %v279 = vsub.f32 %v249, %v277
        %v280 = vsub.f32 %v250, %v277
        %v281 = vmul.f32 %v279, %v279
        %v282 = vmul.f32 %v280, %v280
        %v285 = vcombine.high %v281, %v281
        %v286 = vcombine.high %v282, %v282
        %v289 = vsel %vm257, %v281, 0.0
        %v290 = vsel %vm257, %v282, 0.0
        %v291 = vadd.f32 %v289, %v290
        %v292 = vsel %vm257, %v285, 0.0
        %v293 = vsel %vm257, %v286, 0.0
        %v294 = vadd.f32 %v292, %v293
        %v295 = vsel %vm257, %v291, 0.0
        %v296 = vsel %vm257, %v294, 0.0
        %v297 = vadd.f32 %v295, %v296
        %298 = vadd.xlane.f32.xlu0 %v297
        %v299 = vpop.xlane.xlu0 %298
        %v300 = vmul.f32 %v299, 0.001953125
        %v301 = vld [vmem:[#allocation5] sm:$0xf]
        %v302 = vadd.f32 %v300, 1e-05
        %v303 = vrsqrt.pop %v302
        %v304 = vmul.f32 %v301, %v303
        %306 = vset.pattern.permute.xlu0 0
        %307 = vperm.xlu0 %306, %v304
        %v308 = vpop.permute.xlu0 %307
        %v310 = vunpack.c.l.s4 839922192
        %v311 = vunpack.c.0.s8 %v310
        %v312 = vlaneseq
        %v313 = vshrl.u32 %v312, 7
        %v314 = vsub.s32 %v311, %v313
        %v315 = vrot.slane %v308, %v314
        %v317 = vmul.f32 %v279, %v315
        %v318 = vmul.f32 %v280, %v315
        %v319 = vld [vmem:[#allocation7] sm:$0xf]
        %321 = vset.pattern.permute.xlu0 0
        %322 = vperm.xlu0 %321, %v319
        %v323 = vpop.permute.xlu0 %322
        %v325 = vunpack.c.l.s4 839922192
        %v326 = vunpack.c.0.s8 %v325
        %v327 = vlaneseq
        %v328 = vshrl.u32 %v327, 7
        %v329 = vsub.s32 %v326, %v328
        %v330 = vrot.slane %v323, %v329
        %v332 = vadd.f32 %v317, %v330
        %v333 = vadd.f32 %v318, %v330
        %334 = vst [vmem:[%s246] sm:$0xff] %v332
        %335 = vst [vmem:[%s246 + $0x8] sm:$0xff] %v333
        %s336 = sand.u32 %s123, 1
        %s337 = scalar_lea.sflag [#allocation4], %s336
        %s338 = sand.u32 %s123, 1
        %s339 = smul.addr %s338, 16
        %s340 = scalar_lea.vmem [#allocation8], %s339
        // Predicated region
        $region45: #{tpu_custom_call.1} parent=31 // pred_check
          %p341 = pneg %p133
        $region46: #{tpu_custom_call.1} parent=31 // pred_check_branch
          %343 = sbr.rel (%p341) target = $region48
        $region47: #{tpu_custom_call.1} parent=31 // pred_region
          %s344 = smul.u32 2, %s25
          %s346 = ssub.s32 256, 256
          %347 = vsyncadd %s337, %s346
          %s348 = smul.addr %s26, 2
          %s349 = smul.addr %s344, 2
          %s350 = sadd.s32 %s348, %s349
          %s351 = smul.addr %s350, 64
          %s352 = scalar_lea.hbm %s3, %s351
          %s353 = sshll.u32 %s340, 4
          %s354 = int_to_ptr.vmem [resolvable:$true] %s353
          %359 = dma.vmem_to_hbm [thread:$0]  %s354, 256, %s352, %s337, 128, 128, 8
        $region48: #{tpu_custom_call.1} parent=31 // pred_fallthru
          _
      $region32: #{tpu_custom_call.1} parent=5 // pred_fallthru
        _
      %p360 = scmp.le.s32.totalorder 2, %s16
      // Predicated region
      $region49: #{tpu_custom_call.1} parent=5 // pred_check
        %p361 = pneg %p360
      $region50: #{tpu_custom_call.1} parent=5 // pred_check_branch
        %363 = sbr.rel (%p361) target = $region52
      $region51: #{tpu_custom_call.1} parent=5 // pred_region
        %s364 = ssub.s32 %s16, 2
        // Predicated region
        $region53: #{tpu_custom_call.1} parent=51 // pred_check
          %p365 = pneg %p139
        $region54: #{tpu_custom_call.1} parent=51 // pred_check_branch
          %367 = sbr.rel (%p365) target = $region56
        $region55: #{tpu_custom_call.1} parent=51 // pred_region
          %s368 = sand.u32 %s124, 1
          %s369 = scalar_lea.sflag [#allocation4], %s368
          %s370 = sand.u32 %s124, 1
          %s371 = smul.addr %s370, 16
          %s372 = scalar_lea.vmem [#allocation8], %s371
          %373 = dma.done %s369, 256
        $region56: #{tpu_custom_call.1} parent=51 // pred_fallthru
          _
      $region52: #{tpu_custom_call.1} parent=5 // pred_fallthru
        _
    $region6: #{tpu_custom_call.1} parent=1 // loop_footer
      %s20 = sadd.s32 1, %s16
    $region7: #{tpu_custom_call.1} parent=1 // loop_footer_branch
      %15 = sbr.rel target = $region3
    $region8: #{tpu_custom_call.1} parent=1 // loop_exit
      _
    %374 = vsyncpa [#allocation3], 1
    %s375 = scalar_lea.sflag [#allocation3], 1
    %376 = vsyncpa %s375, 1
    %377 = vsyncpa [#allocation6], 1
    %378 = vsyncpa [#allocation4], 1
    %s379 = scalar_lea.sflag [#allocation4], 1
    %380 = vsyncpa %s379, 1

</llo_original>
